<compile_context>
chip_gen: v5e
topology: v5e:2x2
jax: 0.10.0
libtpu: 0.0.40
codegen_flags: <defaults>
</compile_context>

<pallas_src>
import functools

import jax
import jax.numpy as jnp
from jax.experimental import pallas as pl
from jax.experimental.pallas import tpu as pltpu

_LANE = 128
_SUBLANE_F32 = 8
_SUBLANE_BF16 = 16


def _round_up(x, m):
    return ((x + m - 1) // m) * m


def _vmem_capacity_bytes():
    """Per-generation VMEM size; conservative 64 MiB (v7x) if query fails."""
    try:
        return int(pltpu.get_tpu_info().vmem_capacity_bytes)
    except Exception:
        return 64 * (1 << 20)


def _num_tensorcores():
    """Best-effort TensorCore count (2 on v7x megacore, 1 on v5e/v6e)."""
    try:
        return max(1, int(getattr(jax.devices()[0], "num_cores", 1)))
    except Exception:
        return 1


def _fused_mlp_kernel(*refs, num_layers, compute_dtype):
    # refs = (x_ref, w0_ref, b0_ref, w1_ref, b1_ref, ..., o_ref)
    x_ref = refs[0]
    o_ref = refs[-1]
    params = refs[1:-1]

    h = x_ref[...]
    for li in range(num_layers):                 # static layer count -> unrolled
        w = params[2 * li][...]                   # (Din_pad, Dout_pad), compute_dtype
        b = params[2 * li + 1][...]               # (1, Dout_pad), f32
        acc = jnp.dot(h.astype(compute_dtype), w,
                      preferred_element_type=jnp.float32)   # bf16 MXU, f32 acc
        h = jnp.maximum(acc + b, 0.0)             # f32 bias + ReLU epilogue (VPU)
    o_ref[...] = h.astype(o_ref.dtype)


def _layer_kernel(x_ref, w_ref, b_ref, o_ref, acc_ref, *, compute_dtype):
    """Fallback: single Linear+ReLU layer, (M, N, K)-tiled with f32 accumulator."""
    @pl.when(pl.program_id(2) == 0)
    def _():
        acc_ref[...] = jnp.zeros_like(acc_ref)

    acc_ref[...] += jnp.dot(x_ref[...].astype(compute_dtype), w_ref[...],
                            preferred_element_type=jnp.float32)

    @pl.when(pl.program_id(2) == pl.num_programs(2) - 1)
    def _():
        o_ref[...] = jnp.maximum(acc_ref[...] + b_ref[...], 0.0).astype(o_ref.dtype)


class DNNPallas:
    """JAX/Pallas port of the PyTorch DNN module (MLP with per-layer ReLU)."""

    def __init__(self, inputs_dim, hidden_units, activation="relu",
                 dropout_rate=0.0, use_bn=False, init_std=1e-4, seed=1024,
                 compute_dtype=jnp.bfloat16):
        if len(hidden_units) == 0:
            raise ValueError("hidden_units is empty!!")
        assert activation == "relu", "only relu activation implemented"
        assert not use_bn, "use_bn=False path implemented"

        self.compute_dtype = compute_dtype
        dims = [inputs_dim] + list(hidden_units)
        self.dims = dims
        self.dims_pad = [_round_up(d, _LANE) for d in dims]

        key = jax.random.PRNGKey(seed)
        self.weights, self.biases = [], []          # unpadded f32 (reference)
        self.weights_pad, self.biases_pad = [], []  # lane-padded (kernel)
        for i in range(len(dims) - 1):
            fan_in, fan_out = dims[i], dims[i + 1]
            key, kw, kb = jax.random.split(key, 3)
            # PyTorch nn.Linear weight is (out,in); DNN re-inits it N(0, init_std).
            # Stored transposed as (in, out) for x @ W.
            w = init_std * jax.random.normal(kw, (fan_in, fan_out), dtype=jnp.float32)
            bound = 1.0 / (fan_in ** 0.5)
            b = jax.random.uniform(kb, (fan_out,), dtype=jnp.float32,
                                   minval=-bound, maxval=bound)
            self.weights.append(w)
            self.biases.append(b)

            dpi, dpo = self.dims_pad[i], self.dims_pad[i + 1]
            wp = jnp.zeros((dpi, dpo), compute_dtype).at[:fan_in, :fan_out].set(
                w.astype(compute_dtype))
            bp = jnp.zeros((1, dpo), jnp.float32).at[0, :fan_out].set(b)
            self.weights_pad.append(wp)
            self.biases_pad.append(bp)

    # ------------------------------------------------------------------ sizing
    def _plan(self, B_pad, sublane):
        vmem_cap = _vmem_capacity_bytes()
        budget = int(0.75 * vmem_cap)     # headroom for Mosaic internal scratch
        param_bytes = sum(int(w.nbytes) + int(b.nbytes)
                          for w, b in zip(self.weights_pad, self.biases_pad))
        max_dim = max(self.dims_pad)
        # Per batch-row VMEM: double-buffered in/out tiles + live f32 intermediates.
        per_row = 4 * (2 * self.dims_pad[0] + 2 * self.dims_pad[-1] + 2 * max_dim)

        tm = 256                          # 128-256 keeps MXU fed without vreg spill
        while tm > sublane and param_bytes + tm * per_row > budget:
            tm //= 2
        tm = max(tm, sublane)
        fused_ok = param_bytes + tm * per_row <= budget

        tm = min(tm, _round_up(B_pad, sublane))
        # v7x megacore: keep >= num_cores batch grid steps so "parallel" can shard.
        ncores = _num_tensorcores()
        if ncores > 1 and B_pad >= 2 * sublane:
            tm = min(tm, max(sublane, _round_up(-(-B_pad // ncores), sublane)))
        return fused_ok, tm, vmem_cap, param_bytes, per_row

    # ------------------------------------------------------------------ fused path
    def _fused_forward(self, x_pad, tm, vmem_limit, single_buffer_params):
        B_pad, Din_pad = x_pad.shape
        Dout_pad = self.dims_pad[-1]
        num_layers = len(self.weights_pad)

        pm = {"pipeline_mode": pl.Buffered(1)} if single_buffer_params else {}
        in_specs = [pl.BlockSpec((tm, Din_pad), lambda i: (i, 0))]
        params_flat = []
        for li in range(num_layers):
            dpi, dpo = self.dims_pad[li], self.dims_pad[li + 1]
            in_specs.append(pl.BlockSpec((dpi, dpo), lambda i: (0, 0), **pm))  # weight
            in_specs.append(pl.BlockSpec((1, dpo), lambda i: (0, 0), **pm))    # bias
            params_flat += [self.weights_pad[li], self.biases_pad[li]]
        out_specs = pl.BlockSpec((tm, Dout_pad), lambda i: (i, 0))

        kernel = functools.partial(_fused_mlp_kernel, num_layers=num_layers,
                                   compute_dtype=self.compute_dtype)
        grid_m = (B_pad + tm - 1) // tm
        return pl.pallas_call(
            kernel,
            out_shape=jax.ShapeDtypeStruct((B_pad, Dout_pad), x_pad.dtype),
            grid=(grid_m,),
            in_specs=in_specs,
            out_specs=out_specs,
            compiler_params=pltpu.CompilerParams(
                dimension_semantics=("parallel",),   # shard batch over TCs on v7x
                vmem_limit_bytes=vmem_limit,
            ),
        )(x_pad, *params_flat)

    # ------------------------------------------------------------------ fallback
    def _layered_forward(self, x_pad, out_dtype):
        """Per-layer tiled matmul+bias+ReLU when resident weights exceed VMEM."""
        B_pad = x_pad.shape[0]
        num_layers = len(self.weights_pad)
        tm = min(256, _round_up(B_pad, _SUBLANE_BF16))
        h = x_pad
        for li in range(num_layers):
            dpi, dpo = self.dims_pad[li], self.dims_pad[li + 1]
            layer_out_dtype = out_dtype if li == num_layers - 1 else self.compute_dtype
            tn = next(t for t in (512, 256, 128) if dpo % t == 0)
            tk = next(t for t in (512, 256, 128) if dpi % t == 0)
            kernel = functools.partial(_layer_kernel, compute_dtype=self.compute_dtype)
            grid_m = (B_pad + tm - 1) // tm
            h = pl.pallas_call(
                kernel,
                out_shape=jax.ShapeDtypeStruct((B_pad, dpo), layer_out_dtype),
                grid=(grid_m, dpo // tn, dpi // tk),
                in_specs=[pl.BlockSpec((tm, tk), lambda i, j, k: (i, k)),
                          pl.BlockSpec((tk, tn), lambda i, j, k: (k, j)),
                          pl.BlockSpec((1, tn), lambda i, j, k: (0, j))],
                out_specs=pl.BlockSpec((tm, tn), lambda i, j, k: (i, j)),
                scratch_shapes=[pltpu.VMEM((tm, tn), jnp.float32)],
                compiler_params=pltpu.CompilerParams(
                    dimension_semantics=("parallel", "parallel", "arbitrary")),
            )(h, self.weights_pad[li], self.biases_pad[li])
        return h

    # ------------------------------------------------------------------ forward
    def __call__(self, x):
        orig_shape = x.shape
        Din = orig_shape[-1]
        assert Din == self.dims[0]
        x2 = x.reshape(-1, Din)                  # nD input: flatten leading dims
        B = x2.shape[0]
        Din_pad = self.dims_pad[0]
        Dout, Dout_pad = self.dims[-1], self.dims_pad[-1]

        sublane = _SUBLANE_BF16 if jnp.dtype(x.dtype).itemsize < 4 else _SUBLANE_F32
        B_pad = _round_up(B, sublane)            # pad batch only to sublane multiple

        fused_ok, tm, vmem_cap, param_bytes, per_row = self._plan(B_pad, sublane)

        # Skip the wrapper-side pad pass entirely when shapes are already aligned.
        if B_pad != B or Din_pad != Din:
            x_pad = jnp.zeros((B_pad, Din_pad), x.dtype).at[:B, :Din].set(x2)
        else:
            x_pad = x2

        if fused_ok:
            est = param_bytes + tm * per_row
            vmem_limit = int(min(max(2 * est, 32 << 20), int(0.9 * vmem_cap)))
            try:
                out_pad = self._fused_forward(x_pad, tm, vmem_limit,
                                              single_buffer_params=True)
            except Exception:
                # TODO(synk): drop retry once pl.Buffered(1) is supported everywhere.
                out_pad = self._fused_forward(x_pad, tm, vmem_limit,
                                              single_buffer_params=False)
        else:
            out_pad = self._layered_forward(x_pad, x.dtype)

        out = out_pad
        if B_pad != B or Dout_pad != Dout:
            out = out[:B, :Dout]
        return out.reshape(orig_shape[:-1] + (Dout,))


def _reference_forward(x, weights, biases, compute_dtype=None):
    out = x
    for w, b in zip(weights, biases):
        if compute_dtype is not None:
            acc = jnp.dot(out.astype(compute_dtype), w.astype(compute_dtype),
                          preferred_element_type=jnp.float32)
        else:
            acc = out @ w
        out = jnp.maximum(acc + b, 0.0)
    return out


if __name__ == "__main__":
    batch = 8
    inputs_dim = 32
    hidden_units = (64, 32)

    model = DNNPallas(inputs_dim, hidden_units)

    key = jax.random.PRNGKey(0)
    x = jax.random.normal(key, (batch, inputs_dim), dtype=jnp.float32)

    out = jax.block_until_ready(model(x))
    assert out.shape == (batch, hidden_units[-1])

    # Tight check against a reference that uses the same bf16-operand / f32-acc
    # arithmetic, plus a looser check against the pure-f32 PyTorch semantics.
    ref_bf16 = _reference_forward(x, model.weights, model.biases,
                                  compute_dtype=model.compute_dtype)
    ref_f32 = _reference_forward(x, model.weights, model.biases)
    assert jnp.allclose(out, ref_bf16, atol=1e-5, rtol=1e-4), \
        float(jnp.max(jnp.abs(out - ref_bf16)))
    assert jnp.allclose(out, ref_f32, atol=5e-3, rtol=5e-2), \
        float(jnp.max(jnp.abs(out - ref_f32)))

    print("KERNEL_OK")
</pallas_src>

<mosaic_0001>
module attributes {stable_mosaic.version = 11 : i64} {
  func.func @_fused_mlp_kernel(%arg0: i32, %arg1: memref<8x128xf32, #tpu.memory_space<vmem>>, %arg2: memref<128x128xbf16, #tpu.memory_space<vmem>>, %arg3: memref<1x128xf32, #tpu.memory_space<vmem>>, %arg4: memref<128x128xbf16, #tpu.memory_space<vmem>>, %arg5: memref<1x128xf32, #tpu.memory_space<vmem>>, %arg6: memref<8x128xf32, #tpu.memory_space<vmem>>) attributes {dimension_semantics = [#tpu.dimension_semantics<parallel>], iteration_bounds = array<i64: 1>, scalar_prefetch = 0 : i64, scratch_operands = 0 : i64, tpu.core_type = #tpu.core_type<tc>, window_params = [{transform_indices = @transform_0, window_bounds = array<i64: 8, 128>}, {pipeline_mode = #tpu.pipeline_mode<synchronous>, transform_indices = @transform_1, window_bounds = array<i64: 128, 128>}, {pipeline_mode = #tpu.pipeline_mode<synchronous>, transform_indices = @transform_2, window_bounds = array<i64: 1, 128>}, {pipeline_mode = #tpu.pipeline_mode<synchronous>, transform_indices = @transform_3, window_bounds = array<i64: 128, 128>}, {pipeline_mode = #tpu.pipeline_mode<synchronous>, transform_indices = @transform_4, window_bounds = array<i64: 1, 128>}, {transform_indices = @transform_5, window_bounds = array<i64: 8, 128>}]} {
    %c0 = arith.constant 0 : index
    %c0_0 = arith.constant 0 : index
    %0 = vector.load %arg1[%c0, %c0_0] : memref<8x128xf32, #tpu.memory_space<vmem>>, vector<8x128xf32>
    %c0_1 = arith.constant 0 : index
    %c0_2 = arith.constant 0 : index
    %1 = vector.load %arg2[%c0_1, %c0_2] : memref<128x128xbf16, #tpu.memory_space<vmem>>, vector<128x128xbf16>
    %c0_3 = arith.constant 0 : index
    %c0_4 = arith.constant 0 : index
    %2 = vector.load %arg3[%c0_3, %c0_4] : memref<1x128xf32, #tpu.memory_space<vmem>>, vector<1x128xf32>
    %3 = arith.truncf %0 : vector<8x128xf32> to vector<8x128xbf16>
    %cst = arith.constant dense<0.000000e+00> : vector<8x128xf32>
    %4 = tpu.matmul %3, %1, %cst {dimension_numbers = #tpu.dot_dimension_numbers<[1], [0], [0], [1], [0, 0, 1, 1], [], []>} : vector<8x128xbf16>, vector<128x128xbf16>, vector<8x128xf32> -> vector<8x128xf32>
    %5 = vector.broadcast %2 : vector<1x128xf32> to vector<8x128xf32>
    %6 = arith.addf %4, %5 : vector<8x128xf32>
    %cst_5 = arith.constant 0.000000e+00 : f32
    %7 = vector.broadcast %cst_5 : f32 to vector<8x128xf32>
    %8 = arith.maximumf %6, %7 : vector<8x128xf32>
    %c0_6 = arith.constant 0 : index
    %c0_7 = arith.constant 0 : index
    %9 = vector.load %arg4[%c0_6, %c0_7] : memref<128x128xbf16, #tpu.memory_space<vmem>>, vector<128x128xbf16>
    %c0_8 = arith.constant 0 : index
    %c0_9 = arith.constant 0 : index
    %10 = vector.load %arg5[%c0_8, %c0_9] : memref<1x128xf32, #tpu.memory_space<vmem>>, vector<1x128xf32>
    %11 = arith.truncf %8 : vector<8x128xf32> to vector<8x128xbf16>
    %cst_10 = arith.constant dense<0.000000e+00> : vector<8x128xf32>
    %12 = tpu.matmul %11, %9, %cst_10 {dimension_numbers = #tpu.dot_dimension_numbers<[1], [0], [0], [1], [0, 0, 1, 1], [], []>} : vector<8x128xbf16>, vector<128x128xbf16>, vector<8x128xf32> -> vector<8x128xf32>
    %13 = vector.broadcast %10 : vector<1x128xf32> to vector<8x128xf32>
    %14 = arith.addf %12, %13 : vector<8x128xf32>
    %cst_11 = arith.constant 0.000000e+00 : f32
    %15 = vector.broadcast %cst_11 : f32 to vector<8x128xf32>
    %16 = arith.maximumf %14, %15 : vector<8x128xf32>
    %c0_12 = arith.constant 0 : index
    %c0_13 = arith.constant 0 : index
    %17 = vector.load %arg6[%c0_12, %c0_13] : memref<8x128xf32, #tpu.memory_space<vmem>>, vector<8x128xf32>
    tpu.vector_store %arg6[%c0_12, %c0_13], %16 {strides = array<i32>} : memref<8x128xf32, #tpu.memory_space<vmem>>, vector<8x128xf32>,
    return
  }
  func.func @transform_0(%arg0: i32) -> (i32, i32) {
    %c0_i32 = arith.constant 0 : i32
    %c0_i32_0 = arith.constant 0 : i32
    return %arg0, %c0_i32 : i32, i32
  }
  func.func @transform_1(%arg0: i32) -> (i32, i32) {
    %c0_i32 = arith.constant 0 : i32
    %c0_i32_0 = arith.constant 0 : i32
    %c0_i32_1 = arith.constant 0 : i32
    return %c0_i32, %c0_i32_0 : i32, i32
  }
  func.func @transform_2(%arg0: i32) -> (i32, i32) {
    %c0_i32 = arith.constant 0 : i32
    %c0_i32_0 = arith.constant 0 : i32
    %c0_i32_1 = arith.constant 0 : i32
    return %c0_i32, %c0_i32_0 : i32, i32
  }
  func.func @transform_3(%arg0: i32) -> (i32, i32) {
    %c0_i32 = arith.constant 0 : i32
    %c0_i32_0 = arith.constant 0 : i32
    %c0_i32_1 = arith.constant 0 : i32
    return %c0_i32, %c0_i32_0 : i32, i32
  }
  func.func @transform_4(%arg0: i32) -> (i32, i32) {
    %c0_i32 = arith.constant 0 : i32
    %c0_i32_0 = arith.constant 0 : i32
    %c0_i32_1 = arith.constant 0 : i32
    return %c0_i32, %c0_i32_0 : i32, i32
  }
  func.func @transform_5(%arg0: i32) -> (i32, i32) {
    %c0_i32 = arith.constant 0 : i32
    %c0_i32_0 = arith.constant 0 : i32
    return %arg0, %c0_i32 : i32, i32
  }
}

module attributes {stable_mosaic.version = 11 : i64} {
  func.func @_fused_mlp_kernel(%arg0: i32, %arg1: memref<8x128xf32, #tpu.memory_space<vmem>>, %arg2: memref<128x128xbf16, #tpu.memory_space<vmem>>, %arg3: memref<1x128xf32, #tpu.memory_space<vmem>>, %arg4: memref<128x128xbf16, #tpu.memory_space<vmem>>, %arg5: memref<1x128xf32, #tpu.memory_space<vmem>>, %arg6: memref<8x128xf32, #tpu.memory_space<vmem>>) attributes {dimension_semantics = [#tpu.dimension_semantics<parallel>], iteration_bounds = array<i64: 1>, scalar_prefetch = 0 : i64, scratch_operands = 0 : i64, tpu.core_type = #tpu.core_type<tc>, window_params = [{transform_indices = @transform_0, window_bounds = array<i64: 8, 128>}, {pipeline_mode = #tpu.pipeline_mode<synchronous>, transform_indices = @transform_1, window_bounds = array<i64: 128, 128>}, {pipeline_mode = #tpu.pipeline_mode<synchronous>, transform_indices = @transform_2, window_bounds = array<i64: 1, 128>}, {pipeline_mode = #tpu.pipeline_mode<synchronous>, transform_indices = @transform_3, window_bounds = array<i64: 128, 128>}, {pipeline_mode = #tpu.pipeline_mode<synchronous>, transform_indices = @transform_4, window_bounds = array<i64: 1, 128>}, {transform_indices = @transform_5, window_bounds = array<i64: 8, 128>}]} {
    %c0 = arith.constant 0 : index
    %c0_0 = arith.constant 0 : index
    %0 = vector.load %arg1[%c0, %c0_0] : memref<8x128xf32, #tpu.memory_space<vmem>>, vector<8x128xf32>
    %c0_1 = arith.constant 0 : index
    %c0_2 = arith.constant 0 : index
    %1 = vector.load %arg2[%c0_1, %c0_2] : memref<128x128xbf16, #tpu.memory_space<vmem>>, vector<128x128xbf16>
    %c0_3 = arith.constant 0 : index
    %c0_4 = arith.constant 0 : index
    %2 = vector.load %arg3[%c0_3, %c0_4] : memref<1x128xf32, #tpu.memory_space<vmem>>, vector<1x128xf32>
    %3 = arith.truncf %0 : vector<8x128xf32> to vector<8x128xbf16>
    %cst = arith.constant dense<0.000000e+00> : vector<8x128xf32>
    %4 = tpu.matmul %3, %1, %cst {dimension_numbers = #tpu.dot_dimension_numbers<[1], [0], [0], [1], [0, 0, 1, 1], [], []>} : vector<8x128xbf16>, vector<128x128xbf16>, vector<8x128xf32> -> vector<8x128xf32>
    %5 = vector.broadcast %2 : vector<1x128xf32> to vector<8x128xf32>
    %6 = arith.addf %4, %5 : vector<8x128xf32>
    %cst_5 = arith.constant 0.000000e+00 : f32
    %7 = vector.broadcast %cst_5 : f32 to vector<8x128xf32>
    %8 = arith.maximumf %6, %7 : vector<8x128xf32>
    %c0_6 = arith.constant 0 : index
    %c0_7 = arith.constant 0 : index
    %9 = vector.load %arg4[%c0_6, %c0_7] : memref<128x128xbf16, #tpu.memory_space<vmem>>, vector<128x128xbf16>
    %c0_8 = arith.constant 0 : index
    %c0_9 = arith.constant 0 : index
    %10 = vector.load %arg5[%c0_8, %c0_9] : memref<1x128xf32, #tpu.memory_space<vmem>>, vector<1x128xf32>
    %11 = arith.truncf %8 : vector<8x128xf32> to vector<8x128xbf16>
    %cst_10 = arith.constant dense<0.000000e+00> : vector<8x128xf32>
    %12 = tpu.matmul %11, %9, %cst_10 {dimension_numbers = #tpu.dot_dimension_numbers<[1], [0], [0], [1], [0, 0, 1, 1], [], []>} : vector<8x128xbf16>, vector<128x128xbf16>, vector<8x128xf32> -> vector<8x128xf32>
    %13 = vector.broadcast %10 : vector<1x128xf32> to vector<8x128xf32>
    %14 = arith.addf %12, %13 : vector<8x128xf32>
    %cst_11 = arith.constant 0.000000e+00 : f32
    %15 = vector.broadcast %cst_11 : f32 to vector<8x128xf32>
    %16 = arith.maximumf %14, %15 : vector<8x128xf32>
    %c0_12 = arith.constant 0 : index
    %c0_13 = arith.constant 0 : index
    %17 = vector.load %arg6[%c0_12, %c0_13] : memref<8x128xf32, #tpu.memory_space<vmem>>, vector<8x128xf32>
    tpu.vector_store %arg6[%c0_12, %c0_13], %16 {strides = array<i32>} : memref<8x128xf32, #tpu.memory_space<vmem>>, vector<8x128xf32>,
    return
  }
  func.func @transform_0(%arg0: i32) -> (i32, i32) {
    %c0_i32 = arith.constant 0 : i32
    %c0_i32_0 = arith.constant 0 : i32
    return %arg0, %c0_i32 : i32, i32
  }
  func.func @transform_1(%arg0: i32) -> (i32, i32) {
    %c0_i32 = arith.constant 0 : i32
    %c0_i32_0 = arith.constant 0 : i32
    %c0_i32_1 = arith.constant 0 : i32
    return %c0_i32, %c0_i32_0 : i32, i32
  }
  func.func @transform_2(%arg0: i32) -> (i32, i32) {
    %c0_i32 = arith.constant 0 : i32
    %c0_i32_0 = arith.constant 0 : i32
    %c0_i32_1 = arith.constant 0 : i32
    return %c0_i32, %c0_i32_0 : i32, i32
  }
  func.func @transform_3(%arg0: i32) -> (i32, i32) {
    %c0_i32 = arith.constant 0 : i32
    %c0_i32_0 = arith.constant 0 : i32
    %c0_i32_1 = arith.constant 0 : i32
    return %c0_i32, %c0_i32_0 : i32, i32
  }
  func.func @transform_4(%arg0: i32) -> (i32, i32) {
    %c0_i32 = arith.constant 0 : i32
    %c0_i32_0 = arith.constant 0 : i32
    %c0_i32_1 = arith.constant 0 : i32
    return %c0_i32, %c0_i32_0 : i32, i32
  }
  func.func @transform_5(%arg0: i32) -> (i32, i32) {
    %c0_i32 = arith.constant 0 : i32
    %c0_i32_0 = arith.constant 0 : i32
    return %arg0, %c0_i32 : i32, i32
  }
}

</mosaic_0001>

<llo_original>
// kernel: tpu_custom_call.1
$region0: #{tpu_custom_call.1}
  #allocation0 [shape = 'u32[]', space=smem, size = 0x4, offset = 0x4, fixed_abs, tag = 'smem constant byte address 0x4 - core index']
  #allocation1 [shape = 'u32[72,128]{1,0:T(1,128)}', space=vmem, size = 0x9000, scoped, tag = 'internal scratch']
  %s0 = inlined_call_operand.hbm [shape: f32[8,128], index: 0, kind: input, shape index: {}]
  %s1 = inlined_call_operand.hbm [shape: bf16[128,128], index: 1, kind: input, shape index: {}]
  %s2 = inlined_call_operand.vmem [shape: f32[1,128], index: 2, kind: input, shape index: {}]
  %s3 = inlined_call_operand.hbm [shape: bf16[128,128], index: 3, kind: input, shape index: {}]
  %s4 = inlined_call_operand.vmem [shape: f32[1,128], index: 4, kind: input, shape index: {}]
  %s5 = inlined_call_operand.hbm [shape: f32[8,128], index: 5, kind: output, shape index: {}]
  %s6 = sld [smem:[#allocation0]]
  $region42: #{tpu_custom_call.1} parent=0
    _
  %s8 = ssub.s32 1, %s6
  %s9 = scalar_select 0, %s8, %s6
  $region1: #{tpu_custom_call.1} parent=0
    #allocation2 [shape = 'u8[4096]{0}', space=vmem, size = 0x1000, scoped, tag = 'input window, operand 0, single buffered']
    #allocation3 [shape = 's32[1]{0}', space=sflag, size = 0x4, scoped, tag = 'scoped memory for tpu_custom_call.1']
    #allocation4 [shape = 's32[1]{0}', space=sflag, size = 0x4, scoped, tag = 'scoped memory for tpu_custom_call.1']
    #allocation5 [shape = 'u8[32768]{0}', space=vmem, size = 0x8000, scoped, tag = 'input window, operand 1, single buffered']
    #allocation6 [shape = 's32[1]{0}', space=sflag, size = 0x4, scoped, tag = 'scoped memory for tpu_custom_call.1']
    #allocation7 [shape = 'u8[32768]{0}', space=vmem, size = 0x8000, scoped, tag = 'input window, operand 3, single buffered']
    #allocation8 [shape = 'u8[4096]{0}', space=vmem, size = 0x1000, scoped, tag = 'output window, operand 0, single buffered']
    %10 = vsyncpa [#allocation3], 0
    %11 = vsyncpa [#allocation6], 0
    %12 = vsyncpa [#allocation4], 0
    // Predicated region
    $region2: #{tpu_custom_call.1} parent=1 // pred_check
      _
    $region3: #{tpu_custom_call.1} parent=1 // pred_check_branch
      %14 = sbr.rel (0) target = $region5
    $region4: #{tpu_custom_call.1} parent=1 // pred_region
      %16 = vsyncadd [#allocation3], 0
      %s18 = sshll.u32 %s0, 4
      %s19 = int_to_ptr.hbm [resolvable:$true] %s18
      %s20 = sshll.u32 [#allocation2], 4
      %s21 = int_to_ptr.vmem [resolvable:$true] %s20
      %23 = dma.hbm_to_vmem [thread:$0]  %s19, 128, %s21, [#allocation3]
    $region5: #{tpu_custom_call.1} parent=1 // pred_fallthru
      _
    // Predicated region
    $region6: #{tpu_custom_call.1} parent=1 // pred_check
      _
    $region7: #{tpu_custom_call.1} parent=1 // pred_check_branch
      %25 = sbr.rel (0) target = $region9
    $region8: #{tpu_custom_call.1} parent=1 // pred_region
      %27 = vsyncadd [#allocation6], 0
      %s28 = sshll.u32 %s1, 4
      %s29 = int_to_ptr.hbm [resolvable:$true] %s28
      %s30 = sshll.u32 [#allocation5], 4
      %s31 = int_to_ptr.vmem [resolvable:$true] %s30
      %36 = dma.hbm_to_vmem [thread:$0]  %s29, 1024, %s31, [#allocation6], 64, 64, 4
    $region9: #{tpu_custom_call.1} parent=1 // pred_fallthru
      _
    // Predicated region
    $region10: #{tpu_custom_call.1} parent=1 // pred_check
      _
    $region11: #{tpu_custom_call.1} parent=1 // pred_check_branch
      %38 = sbr.rel (0) target = $region13
    $region12: #{tpu_custom_call.1} parent=1 // pred_region
      _
    $region13: #{tpu_custom_call.1} parent=1 // pred_fallthru
      _
    // Predicated region
    $region14: #{tpu_custom_call.1} parent=1 // pred_check
      _
    $region15: #{tpu_custom_call.1} parent=1 // pred_check_branch
      %40 = sbr.rel (0) target = $region17
    $region16: #{tpu_custom_call.1} parent=1 // pred_region
      %42 = vsyncadd [#allocation6], 0
      %s43 = sshll.u32 %s3, 4
      %s44 = int_to_ptr.hbm [resolvable:$true] %s43
      %s45 = sshll.u32 [#allocation7], 4
      %s46 = int_to_ptr.vmem [resolvable:$true] %s45
      %51 = dma.hbm_to_vmem [thread:$0]  %s44, 1024, %s46, [#allocation6], 64, 64, 4
    $region17: #{tpu_custom_call.1} parent=1 // pred_fallthru
      _
    // Predicated region
    $region18: #{tpu_custom_call.1} parent=1 // pred_check
      _
    $region19: #{tpu_custom_call.1} parent=1 // pred_check_branch
      %53 = sbr.rel (0) target = $region21
    $region20: #{tpu_custom_call.1} parent=1 // pred_region
      _
    $region21: #{tpu_custom_call.1} parent=1 // pred_fallthru
      _
    // Predicated region
    $region22: #{tpu_custom_call.1} parent=1 // pred_check
      _
    $region23: #{tpu_custom_call.1} parent=1 // pred_check_branch
      %55 = sbr.rel (0) target = $region25
    $region24: #{tpu_custom_call.1} parent=1 // pred_region
      %57 = dma.done [#allocation3], 128
    $region25: #{tpu_custom_call.1} parent=1 // pred_fallthru
      _
    // Predicated region
    $region26: #{tpu_custom_call.1} parent=1 // pred_check
      _
    $region27: #{tpu_custom_call.1} parent=1 // pred_check_branch
      %59 = sbr.rel (0) target = $region29
    $region28: #{tpu_custom_call.1} parent=1 // pred_region
      %61 = dma.done [#allocation6], 1024
    $region29: #{tpu_custom_call.1} parent=1 // pred_fallthru
      _
    // Predicated region
    $region30: #{tpu_custom_call.1} parent=1 // pred_check
      _
    $region31: #{tpu_custom_call.1} parent=1 // pred_check_branch
      %63 = sbr.rel (0) target = $region33
    $region32: #{tpu_custom_call.1} parent=1 // pred_region
      %65 = dma.done [#allocation6], 1024
    $region33: #{tpu_custom_call.1} parent=1 // pred_fallthru
      _
    %v66 = vld [vmem:[#allocation2] sm:$0xff]
    %v67 = vld [vmem:[#allocation5] sm:$0xf]
    %v68 = vld [vmem:[#allocation5 + $0x4] sm:$0xf]
    %v69 = vld [vmem:[#allocation5 + $0x8] sm:$0xf]
    %v70 = vld [vmem:[#allocation5 + $0xc] sm:$0xf]
    %v71 = vld [vmem:[#allocation5 + $0x10] sm:$0xf]
    %v72 = vld [vmem:[#allocation5 + $0x14] sm:$0xf]
    %v73 = vld [vmem:[#allocation5 + $0x18] sm:$0xf]
    %v74 = vld [vmem:[#allocation5 + $0x1c] sm:$0xf]
    %v75 = vld [vmem:[#allocation5 + $0x20] sm:$0xf]
    %v76 = vld [vmem:[#allocation5 + $0x24] sm:$0xf]
    %v77 = vld [vmem:[#allocation5 + $0x28] sm:$0xf]
    %v78 = vld [vmem:[#allocation5 + $0x2c] sm:$0xf]
    %v79 = vld [vmem:[#allocation5 + $0x30] sm:$0xf]
    %v80 = vld [vmem:[#allocation5 + $0x34] sm:$0xf]
    %v81 = vld [vmem:[#allocation5 + $0x38] sm:$0xf]
    %v82 = vld [vmem:[#allocation5 + $0x3c] sm:$0xf]
    %v83 = vld [vmem:[%s2] sm:$0x1]
    %v84 = vpack.c.bf16 %v66, %v66
    %v86 = vperm.slane %v83, 0
    %v104 = vunpack.c.l.b16 %v67
    %v105 = vunpack.c.l.b16 %v68
    %v106 = vunpack.c.l.b16 %v69
    %v107 = vunpack.c.l.b16 %v70
    %v108 = vunpack.c.l.b16 %v71
    %v109 = vunpack.c.l.b16 %v72
    %v110 = vunpack.c.l.b16 %v73
    %v111 = vunpack.c.l.b16 %v74
    %v112 = vunpack.c.l.b16 %v75
    %v113 = vunpack.c.l.b16 %v76
    %v114 = vunpack.c.l.b16 %v77
    %v115 = vunpack.c.l.b16 %v78
    %v116 = vunpack.c.l.b16 %v79
    %v117 = vunpack.c.l.b16 %v80
    %v118 = vunpack.c.l.b16 %v81
    %v119 = vunpack.c.l.b16 %v82
    %v120 = vpack.c.b16 %v105, %v104
    %v121 = vpack.c.b16 %v107, %v106
    %v122 = vpack.c.b16 %v109, %v108
    %v123 = vpack.c.b16 %v111, %v110
    %v124 = vpack.c.b16 %v113, %v112
    %v125 = vpack.c.b16 %v115, %v114
    %v126 = vpack.c.b16 %v117, %v116
    %v127 = vpack.c.b16 %v119, %v118
    %136 = vmatpush.bf16.msra.mxu0 %v127
    %137 = vmatpush.bf16.msra.mxu0 %v126
    %138 = vmatpush.bf16.msra.mxu0 %v125
    %139 = vmatpush.bf16.msra.mxu0 %v124
    %140 = vmatpush.bf16.msra.mxu0 %v123
    %141 = vmatpush.bf16.msra.mxu0 %v122
    %142 = vmatpush.bf16.msra.mxu0 %v121
    %143 = vmatpush.bf16.msra.mxu0 %v120
    %144 = vmatmul.bf16.gmra.mxu0 %v84
    %v145 = vpop.f32.mrf.mxu0
    %v146 = vadd.f32 %v86, %v145
    %v147 = vpop.f32.mrf.mxu0
    %148 = vdwg.mxu0
    %v149 = vmax.f32 %v146, 0.0
    %v150 = vld [vmem:[#allocation7] sm:$0xf]
    %v151 = vld [vmem:[#allocation7 + $0x4] sm:$0xf]
    %v152 = vld [vmem:[#allocation7 + $0x8] sm:$0xf]
    %v153 = vld [vmem:[#allocation7 + $0xc] sm:$0xf]
    %v154 = vld [vmem:[#allocation7 + $0x10] sm:$0xf]
    %v155 = vld [vmem:[#allocation7 + $0x14] sm:$0xf]
    %v156 = vld [vmem:[#allocation7 + $0x18] sm:$0xf]
    %v157 = vld [vmem:[#allocation7 + $0x1c] sm:$0xf]
    %v158 = vld [vmem:[#allocation7 + $0x20] sm:$0xf]
    %v159 = vld [vmem:[#allocation7 + $0x24] sm:$0xf]
    %v160 = vld [vmem:[#allocation7 + $0x28] sm:$0xf]
    %v161 = vld [vmem:[#allocation7 + $0x2c] sm:$0xf]
    %v162 = vld [vmem:[#allocation7 + $0x30] sm:$0xf]
    %v163 = vld [vmem:[#allocation7 + $0x34] sm:$0xf]
    %v164 = vld [vmem:[#allocation7 + $0x38] sm:$0xf]
    %v165 = vld [vmem:[#allocation7 + $0x3c] sm:$0xf]
    %v166 = vld [vmem:[%s4] sm:$0x1]
    %v167 = vpack.c.bf16 %v149, %v149
    %v169 = vperm.slane %v166, 0
    %v187 = vunpack.c.l.b16 %v150
    %v188 = vunpack.c.l.b16 %v151
    %v189 = vunpack.c.l.b16 %v152
    %v190 = vunpack.c.l.b16 %v153
    %v191 = vunpack.c.l.b16 %v154
    %v192 = vunpack.c.l.b16 %v155
    %v193 = vunpack.c.l.b16 %v156
    %v194 = vunpack.c.l.b16 %v157
    %v195 = vunpack.c.l.b16 %v158
    %v196 = vunpack.c.l.b16 %v159
    %v197 = vunpack.c.l.b16 %v160
    %v198 = vunpack.c.l.b16 %v161
    %v199 = vunpack.c.l.b16 %v162
    %v200 = vunpack.c.l.b16 %v163
    %v201 = vunpack.c.l.b16 %v164
    %v202 = vunpack.c.l.b16 %v165
    %v203 = vpack.c.b16 %v188, %v187
    %v204 = vpack.c.b16 %v190, %v189
    %v205 = vpack.c.b16 %v192, %v191
    %v206 = vpack.c.b16 %v194, %v193
    %v207 = vpack.c.b16 %v196, %v195
    %v208 = vpack.c.b16 %v198, %v197
    %v209 = vpack.c.b16 %v200, %v199
    %v210 = vpack.c.b16 %v202, %v201
    %219 = vmatpush.bf16.msra.mxu0 %v210
    %220 = vmatpush.bf16.msra.mxu0 %v209
    %221 = vmatpush.bf16.msra.mxu0 %v208
    %222 = vmatpush.bf16.msra.mxu0 %v207
    %223 = vmatpush.bf16.msra.mxu0 %v206
    %224 = vmatpush.bf16.msra.mxu0 %v205
    %225 = vmatpush.bf16.msra.mxu0 %v204
    %226 = vmatpush.bf16.msra.mxu0 %v203
    %227 = vmatmul.bf16.gmra.mxu0 %v167
    %v228 = vpop.f32.mrf.mxu0
    %v229 = vadd.f32 %v169, %v228
    %v230 = vpop.f32.mrf.mxu0
    %231 = vdwg.mxu0
    %v232 = vmax.f32 %v229, 0.0
    %233 = vst [vmem:[#allocation8] sm:$0xff] %v232
    // Predicated region
    $region34: #{tpu_custom_call.1} parent=1 // pred_check
      _
    $region35: #{tpu_custom_call.1} parent=1 // pred_check_branch
      %235 = sbr.rel (0) target = $region37
    $region36: #{tpu_custom_call.1} parent=1 // pred_region
      %237 = vsyncadd [#allocation4], 0
      %s239 = sshll.u32 [#allocation8], 4
      %s240 = int_to_ptr.vmem [resolvable:$true] %s239
      %s241 = sshll.u32 %s5, 4
      %s242 = int_to_ptr.hbm [resolvable:$true] %s241
      %244 = dma.vmem_to_hbm [thread:$0]  %s240, 128, %s242, [#allocation4]
    $region37: #{tpu_custom_call.1} parent=1 // pred_fallthru
      _
    // Predicated region
    $region38: #{tpu_custom_call.1} parent=1 // pred_check
      _
    $region39: #{tpu_custom_call.1} parent=1 // pred_check_branch
      %246 = sbr.rel (0) target = $region41
    $region40: #{tpu_custom_call.1} parent=1 // pred_region
      %248 = dma.done [#allocation4], 128
    $region41: #{tpu_custom_call.1} parent=1 // pred_fallthru
      _
    %249 = vsyncpa [#allocation3], 1
    %250 = vsyncpa [#allocation6], 1
    %251 = vsyncpa [#allocation4], 1

// kernel: tpu_custom_call.1
$region0: #{tpu_custom_call.1}
  #allocation0 [shape = 'u32[]', space=smem, size = 0x4, offset = 0x4, fixed_abs, tag = 'smem constant byte address 0x4 - core index']
  #allocation1 [shape = 'u32[72,128]{1,0:T(1,128)}', space=vmem, size = 0x9000, scoped, tag = 'internal scratch']
  %s0 = inlined_call_operand.hbm [shape: f32[8,128], index: 0, kind: input, shape index: {}]
  %s1 = inlined_call_operand.hbm [shape: bf16[128,128], index: 1, kind: input, shape index: {}]
  %s2 = inlined_call_operand.vmem [shape: f32[1,128], index: 2, kind: input, shape index: {}]
  %s3 = inlined_call_operand.hbm [shape: bf16[128,128], index: 3, kind: input, shape index: {}]
  %s4 = inlined_call_operand.vmem [shape: f32[1,128], index: 4, kind: input, shape index: {}]
  %s5 = inlined_call_operand.hbm [shape: f32[8,128], index: 5, kind: output, shape index: {}]
  %s6 = sld [smem:[#allocation0]]
  $region42: #{tpu_custom_call.1} parent=0
    _
  %s8 = ssub.s32 1, %s6
  %s9 = scalar_select 0, %s8, %s6
  $region1: #{tpu_custom_call.1} parent=0
    #allocation2 [shape = 'u8[4096]{0}', space=vmem, size = 0x1000, scoped, tag = 'input window, operand 0, single buffered']
    #allocation3 [shape = 's32[1]{0}', space=sflag, size = 0x4, scoped, tag = 'scoped memory for tpu_custom_call.1']
    #allocation4 [shape = 's32[1]{0}', space=sflag, size = 0x4, scoped, tag = 'scoped memory for tpu_custom_call.1']
    #allocation5 [shape = 'u8[32768]{0}', space=vmem, size = 0x8000, scoped, tag = 'input window, operand 1, single buffered']
    #allocation6 [shape = 's32[1]{0}', space=sflag, size = 0x4, scoped, tag = 'scoped memory for tpu_custom_call.1']
    #allocation7 [shape = 'u8[32768]{0}', space=vmem, size = 0x8000, scoped, tag = 'input window, operand 3, single buffered']
    #allocation8 [shape = 'u8[4096]{0}', space=vmem, size = 0x1000, scoped, tag = 'output window, operand 0, single buffered']
    %10 = vsyncpa [#allocation3], 0
    %11 = vsyncpa [#allocation6], 0
    %12 = vsyncpa [#allocation4], 0
    // Predicated region
    $region2: #{tpu_custom_call.1} parent=1 // pred_check
      _
    $region3: #{tpu_custom_call.1} parent=1 // pred_check_branch
      %14 = sbr.rel (0) target = $region5
    $region4: #{tpu_custom_call.1} parent=1 // pred_region
      %16 = vsyncadd [#allocation3], 0
      %s18 = sshll.u32 %s0, 4
      %s19 = int_to_ptr.hbm [resolvable:$true] %s18
      %s20 = sshll.u32 [#allocation2], 4
      %s21 = int_to_ptr.vmem [resolvable:$true] %s20
      %23 = dma.hbm_to_vmem [thread:$0]  %s19, 128, %s21, [#allocation3]
    $region5: #{tpu_custom_call.1} parent=1 // pred_fallthru
      _
    // Predicated region
    $region6: #{tpu_custom_call.1} parent=1 // pred_check
      _
    $region7: #{tpu_custom_call.1} parent=1 // pred_check_branch
      %25 = sbr.rel (0) target = $region9
    $region8: #{tpu_custom_call.1} parent=1 // pred_region
      %27 = vsyncadd [#allocation6], 0
      %s28 = sshll.u32 %s1, 4
      %s29 = int_to_ptr.hbm [resolvable:$true] %s28
      %s30 = sshll.u32 [#allocation5], 4
      %s31 = int_to_ptr.vmem [resolvable:$true] %s30
      %36 = dma.hbm_to_vmem [thread:$0]  %s29, 1024, %s31, [#allocation6], 64, 64, 4
    $region9: #{tpu_custom_call.1} parent=1 // pred_fallthru
      _
    // Predicated region
    $region10: #{tpu_custom_call.1} parent=1 // pred_check
      _
    $region11: #{tpu_custom_call.1} parent=1 // pred_check_branch
      %38 = sbr.rel (0) target = $region13
    $region12: #{tpu_custom_call.1} parent=1 // pred_region
      _
    $region13: #{tpu_custom_call.1} parent=1 // pred_fallthru
      _
    // Predicated region
    $region14: #{tpu_custom_call.1} parent=1 // pred_check
      _
    $region15: #{tpu_custom_call.1} parent=1 // pred_check_branch
      %40 = sbr.rel (0) target = $region17
    $region16: #{tpu_custom_call.1} parent=1 // pred_region
      %42 = vsyncadd [#allocation6], 0
      %s43 = sshll.u32 %s3, 4
      %s44 = int_to_ptr.hbm [resolvable:$true] %s43
      %s45 = sshll.u32 [#allocation7], 4
      %s46 = int_to_ptr.vmem [resolvable:$true] %s45
      %51 = dma.hbm_to_vmem [thread:$0]  %s44, 1024, %s46, [#allocation6], 64, 64, 4
    $region17: #{tpu_custom_call.1} parent=1 // pred_fallthru
      _
    // Predicated region
    $region18: #{tpu_custom_call.1} parent=1 // pred_check
      _
    $region19: #{tpu_custom_call.1} parent=1 // pred_check_branch
      %53 = sbr.rel (0) target = $region21
    $region20: #{tpu_custom_call.1} parent=1 // pred_region
      _
    $region21: #{tpu_custom_call.1} parent=1 // pred_fallthru
      _
    // Predicated region
    $region22: #{tpu_custom_call.1} parent=1 // pred_check
      _
    $region23: #{tpu_custom_call.1} parent=1 // pred_check_branch
      %55 = sbr.rel (0) target = $region25
    $region24: #{tpu_custom_call.1} parent=1 // pred_region
      %57 = dma.done [#allocation3], 128
    $region25: #{tpu_custom_call.1} parent=1 // pred_fallthru
      _
    // Predicated region
    $region26: #{tpu_custom_call.1} parent=1 // pred_check
      _
    $region27: #{tpu_custom_call.1} parent=1 // pred_check_branch
      %59 = sbr.rel (0) target = $region29
    $region28: #{tpu_custom_call.1} parent=1 // pred_region
      %61 = dma.done [#allocation6], 1024
    $region29: #{tpu_custom_call.1} parent=1 // pred_fallthru
      _
    // Predicated region
    $region30: #{tpu_custom_call.1} parent=1 // pred_check
      _
    $region31: #{tpu_custom_call.1} parent=1 // pred_check_branch
      %63 = sbr.rel (0) target = $region33
    $region32: #{tpu_custom_call.1} parent=1 // pred_region
      %65 = dma.done [#allocation6], 1024
    $region33: #{tpu_custom_call.1} parent=1 // pred_fallthru
      _
    %v66 = vld [vmem:[#allocation2] sm:$0xff]
    %v67 = vld [vmem:[#allocation5] sm:$0xf]
    %v68 = vld [vmem:[#allocation5 + $0x4] sm:$0xf]
    %v69 = vld [vmem:[#allocation5 + $0x8] sm:$0xf]
    %v70 = vld [vmem:[#allocation5 + $0xc] sm:$0xf]
    %v71 = vld [vmem:[#allocation5 + $0x10] sm:$0xf]
    %v72 = vld [vmem:[#allocation5 + $0x14] sm:$0xf]
    %v73 = vld [vmem:[#allocation5 + $0x18] sm:$0xf]
    %v74 = vld [vmem:[#allocation5 + $0x1c] sm:$0xf]
    %v75 = vld [vmem:[#allocation5 + $0x20] sm:$0xf]
    %v76 = vld [vmem:[#allocation5 + $0x24] sm:$0xf]
    %v77 = vld [vmem:[#allocation5 + $0x28] sm:$0xf]
    %v78 = vld [vmem:[#allocation5 + $0x2c] sm:$0xf]
    %v79 = vld [vmem:[#allocation5 + $0x30] sm:$0xf]
    %v80 = vld [vmem:[#allocation5 + $0x34] sm:$0xf]
    %v81 = vld [vmem:[#allocation5 + $0x38] sm:$0xf]
    %v82 = vld [vmem:[#allocation5 + $0x3c] sm:$0xf]
    %v83 = vld [vmem:[%s2] sm:$0x1]
    %v84 = vpack.c.bf16 %v66, %v66
    %v86 = vperm.slane %v83, 0
    %v104 = vunpack.c.l.b16 %v67
    %v105 = vunpack.c.l.b16 %v68
    %v106 = vunpack.c.l.b16 %v69
    %v107 = vunpack.c.l.b16 %v70
    %v108 = vunpack.c.l.b16 %v71
    %v109 = vunpack.c.l.b16 %v72
    %v110 = vunpack.c.l.b16 %v73
    %v111 = vunpack.c.l.b16 %v74
    %v112 = vunpack.c.l.b16 %v75
    %v113 = vunpack.c.l.b16 %v76
    %v114 = vunpack.c.l.b16 %v77
    %v115 = vunpack.c.l.b16 %v78
    %v116 = vunpack.c.l.b16 %v79
    %v117 = vunpack.c.l.b16 %v80
    %v118 = vunpack.c.l.b16 %v81
    %v119 = vunpack.c.l.b16 %v82
    %v120 = vpack.c.b16 %v105, %v104
    %v121 = vpack.c.b16 %v107, %v106
    %v122 = vpack.c.b16 %v109, %v108
    %v123 = vpack.c.b16 %v111, %v110
    %v124 = vpack.c.b16 %v113, %v112
    %v125 = vpack.c.b16 %v115, %v114
    %v126 = vpack.c.b16 %v117, %v116
    %v127 = vpack.c.b16 %v119, %v118
    %136 = vmatpush.bf16.msra.mxu0 %v127
    %137 = vmatpush.bf16.msra.mxu0 %v126
    %138 = vmatpush.bf16.msra.mxu0 %v125
    %139 = vmatpush.bf16.msra.mxu0 %v124
    %140 = vmatpush.bf16.msra.mxu0 %v123
    %141 = vmatpush.bf16.msra.mxu0 %v122
    %142 = vmatpush.bf16.msra.mxu0 %v121
    %143 = vmatpush.bf16.msra.mxu0 %v120
    %144 = vmatmul.bf16.gmra.mxu0 %v84
    %v145 = vpop.f32.mrf.mxu0
    %v146 = vadd.f32 %v86, %v145
    %v147 = vpop.f32.mrf.mxu0
    %148 = vdwg.mxu0
    %v149 = vmax.f32 %v146, 0.0
    %v150 = vld [vmem:[#allocation7] sm:$0xf]
    %v151 = vld [vmem:[#allocation7 + $0x4] sm:$0xf]
    %v152 = vld [vmem:[#allocation7 + $0x8] sm:$0xf]
    %v153 = vld [vmem:[#allocation7 + $0xc] sm:$0xf]
    %v154 = vld [vmem:[#allocation7 + $0x10] sm:$0xf]
    %v155 = vld [vmem:[#allocation7 + $0x14] sm:$0xf]
    %v156 = vld [vmem:[#allocation7 + $0x18] sm:$0xf]
    %v157 = vld [vmem:[#allocation7 + $0x1c] sm:$0xf]
    %v158 = vld [vmem:[#allocation7 + $0x20] sm:$0xf]
    %v159 = vld [vmem:[#allocation7 + $0x24] sm:$0xf]
    %v160 = vld [vmem:[#allocation7 + $0x28] sm:$0xf]
    %v161 = vld [vmem:[#allocation7 + $0x2c] sm:$0xf]
    %v162 = vld [vmem:[#allocation7 + $0x30] sm:$0xf]
    %v163 = vld [vmem:[#allocation7 + $0x34] sm:$0xf]
    %v164 = vld [vmem:[#allocation7 + $0x38] sm:$0xf]
    %v165 = vld [vmem:[#allocation7 + $0x3c] sm:$0xf]
    %v166 = vld [vmem:[%s4] sm:$0x1]
    %v167 = vpack.c.bf16 %v149, %v149
    %v169 = vperm.slane %v166, 0
    %v187 = vunpack.c.l.b16 %v150
    %v188 = vunpack.c.l.b16 %v151
    %v189 = vunpack.c.l.b16 %v152
    %v190 = vunpack.c.l.b16 %v153
    %v191 = vunpack.c.l.b16 %v154
    %v192 = vunpack.c.l.b16 %v155
    %v193 = vunpack.c.l.b16 %v156
    %v194 = vunpack.c.l.b16 %v157
    %v195 = vunpack.c.l.b16 %v158
    %v196 = vunpack.c.l.b16 %v159
    %v197 = vunpack.c.l.b16 %v160
    %v198 = vunpack.c.l.b16 %v161
    %v199 = vunpack.c.l.b16 %v162
    %v200 = vunpack.c.l.b16 %v163
    %v201 = vunpack.c.l.b16 %v164
    %v202 = vunpack.c.l.b16 %v165
    %v203 = vpack.c.b16 %v188, %v187
    %v204 = vpack.c.b16 %v190, %v189
    %v205 = vpack.c.b16 %v192, %v191
    %v206 = vpack.c.b16 %v194, %v193
    %v207 = vpack.c.b16 %v196, %v195
    %v208 = vpack.c.b16 %v198, %v197
    %v209 = vpack.c.b16 %v200, %v199
    %v210 = vpack.c.b16 %v202, %v201
    %219 = vmatpush.bf16.msra.mxu0 %v210
    %220 = vmatpush.bf16.msra.mxu0 %v209
    %221 = vmatpush.bf16.msra.mxu0 %v208
    %222 = vmatpush.bf16.msra.mxu0 %v207
    %223 = vmatpush.bf16.msra.mxu0 %v206
    %224 = vmatpush.bf16.msra.mxu0 %v205
    %225 = vmatpush.bf16.msra.mxu0 %v204
    %226 = vmatpush.bf16.msra.mxu0 %v203
    %227 = vmatmul.bf16.gmra.mxu0 %v167
    %v228 = vpop.f32.mrf.mxu0
    %v229 = vadd.f32 %v169, %v228
    %v230 = vpop.f32.mrf.mxu0
    %231 = vdwg.mxu0
    %v232 = vmax.f32 %v229, 0.0
    %233 = vst [vmem:[#allocation8] sm:$0xff] %v232
    // Predicated region
    $region34: #{tpu_custom_call.1} parent=1 // pred_check
      _
    $region35: #{tpu_custom_call.1} parent=1 // pred_check_branch
      %235 = sbr.rel (0) target = $region37
    $region36: #{tpu_custom_call.1} parent=1 // pred_region
      %237 = vsyncadd [#allocation4], 0
      %s239 = sshll.u32 [#allocation8], 4
      %s240 = int_to_ptr.vmem [resolvable:$true] %s239
      %s241 = sshll.u32 %s5, 4
      %s242 = int_to_ptr.hbm [resolvable:$true] %s241
      %244 = dma.vmem_to_hbm [thread:$0]  %s240, 128, %s242, [#allocation4]
    $region37: #{tpu_custom_call.1} parent=1 // pred_fallthru
      _
    // Predicated region
    $region38: #{tpu_custom_call.1} parent=1 // pred_check
      _
    $region39: #{tpu_custom_call.1} parent=1 // pred_check_branch
      %246 = sbr.rel (0) target = $region41
    $region40: #{tpu_custom_call.1} parent=1 // pred_region
      %248 = dma.done [#allocation4], 128
    $region41: #{tpu_custom_call.1} parent=1 // pred_fallthru
      _
    %249 = vsyncpa [#allocation3], 1
    %250 = vsyncpa [#allocation6], 1
    %251 = vsyncpa [#allocation4], 1

</llo_original>
